<compile_context>
chip_gen: v6e
topology: v6e:2x2x1
jax: 0.10.0
libtpu: 0.0.40
codegen_flags: <defaults>
</compile_context>

<pallas_src>
import functools

import jax
import jax.numpy as jnp
from jax.experimental import pallas as pl
from jax.experimental.pallas import tpu as pltpu


def _round_up(n, m):
    return ((n + m - 1) // m) * m


def _decoder_kernel(x_ref, w1_ref, b1_ref, w2_ref, b2_ref, o_ref):
    # Hot path: two MXU matmuls + VPU leaky-relu on the current batch tile.
    # Biases stay f32 and are added after the f32 accumulation.
    x = x_ref[...]
    h = jnp.dot(x, w1_ref[...], preferred_element_type=jnp.float32)
    h = h + b1_ref[...].astype(jnp.float32)
    h = jnp.where(h > 0, h, 0.2 * h)                      # LeakyReLU(0.2)
    y = jnp.dot(h.astype(w2_ref.dtype), w2_ref[...],
                preferred_element_type=jnp.float32)
    y = y + b2_ref[...].astype(jnp.float32)
    o_ref[...] = y.astype(o_ref.dtype)


@functools.partial(jax.jit, static_argnames=("batch_tile", "compute_dtype"))
def otnvae_decoder(x, w1, b1, w2, b2, *, batch_tile=None, compute_dtype=None):
    """x: (B, latent_dim) -> (B, native_dim). Grid tiles over the batch dim."""
    B, latent_dim = x.shape
    hidden = w1.shape[1]
    native_dim = w2.shape[1]
    out_dtype = x.dtype

    # Optional low-precision streaming (v6e/v7x): halves HBM traffic / doubles
    # MXU rate; accumulation stays f32 via preferred_element_type.
    if compute_dtype is not None:
        x = x.astype(compute_dtype)
        w1 = w1.astype(compute_dtype)
        w2 = w2.astype(compute_dtype)

    # --- pick a large, overhead-amortizing batch tile -----------------------
    if batch_tile is None:
        # At least 2 grid steps when possible (megacore on v7x), cap at 1024
        # rows (x tile + padded out tile stay well under the scoped-VMEM
        # default on every chip, even double-buffered).
        half = _round_up(max(pl.cdiv(B, 2), 8), 8)
        batch_tile = min(1024, half)
    batch_tile = _round_up(max(batch_tile, 8), 8)

    # --- ragged batch: zero-pad rows up to a tile multiple ------------------
    Bp = _round_up(B, batch_tile)
    if Bp != B:
        x = jnp.pad(x, ((0, Bp - B), (0, 0)))

    # --- lane-dense output: pad native_dim up to a multiple of 128 ----------
    # (zero columns in W2/b2 -> unmasked full-lane stores; sliced off below)
    Np = _round_up(native_dim, 128)
    if Np != native_dim:
        w2 = jnp.pad(w2, ((0, 0), (0, Np - native_dim)))
        b2 = jnp.pad(b2, ((0, 0), (0, Np - native_dim)))

    grid = (Bp // batch_tile,)

    # Advisory cost hint for XLA's scheduler.
    itemsize = jnp.dtype(x.dtype).itemsize
    out_itemsize = jnp.dtype(out_dtype).itemsize
    flops = 2 * Bp * (latent_dim * hidden + hidden * Np)
    bytes_accessed = (
        Bp * latent_dim * itemsize                      # x
        + (latent_dim * hidden + hidden * Np) * itemsize  # W1, W2
        + (hidden + Np) * jnp.dtype(b1.dtype).itemsize    # b1, b2
        + Bp * Np * out_itemsize                          # output
    )

    out = pl.pallas_call(
        _decoder_kernel,
        out_shape=jax.ShapeDtypeStruct((Bp, Np), out_dtype),
        grid_spec=pltpu.PrefetchScalarGridSpec(
            num_scalar_prefetch=0,
            grid=grid,
            in_specs=[
                pl.BlockSpec((batch_tile, latent_dim), lambda i: (i, 0)),  # x tile
                pl.BlockSpec((latent_dim, hidden), lambda i: (0, 0)),      # W1 (whole)
                pl.BlockSpec((1, hidden), lambda i: (0, 0)),               # b1
                pl.BlockSpec((hidden, Np), lambda i: (0, 0)),              # W2 (whole, N-padded)
                pl.BlockSpec((1, Np), lambda i: (0, 0)),                   # b2 (N-padded)
            ],
            out_specs=pl.BlockSpec((batch_tile, Np), lambda i: (i, 0)),
        ),
        compiler_params=pltpu.CompilerParams(
            dimension_semantics=("parallel",)),
        cost_estimate=pl.CostEstimate(
            flops=int(flops), transcendentals=0,
            bytes_accessed=int(bytes_accessed)),
    )(x, w1, b1, w2, b2)

    # Strip batch/output padding.
    return out[:B, :native_dim]


def init_decoder_params(key, native_dim, hidden_layer, latent_dim, dtype=jnp.float32):
    """Deterministic init matching PyTorch nn.Linear default (U(-1/sqrt(fan_in), ...))."""
    k1, k2, k3, k4 = jax.random.split(key, 4)
    bound1 = 1.0 / jnp.sqrt(latent_dim)
    bound2 = 1.0 / jnp.sqrt(hidden_layer)
    # stored pre-transposed: (in, out)
    w1 = jax.random.uniform(k1, (latent_dim, hidden_layer), dtype, -bound1, bound1)
    b1 = jax.random.uniform(k2, (1, hidden_layer), dtype, -bound1, bound1)
    w2 = jax.random.uniform(k3, (hidden_layer, native_dim), dtype, -bound2, bound2)
    b2 = jax.random.uniform(k4, (1, native_dim), dtype, -bound2, bound2)
    return w1, b1, w2, b2


def reference_decoder(x, w1, b1, w2, b2):
    h = x @ w1 + b1
    h = jnp.where(h > 0, h, 0.2 * h)
    return h @ w2 + b2


if __name__ == "__main__":
    # Small shapes consistent with the module: batch=16, latent=8, hidden=32, native=64
    native_dim, hidden_layer, latent_dim = 64, 32, 8
    batch = 16

    key = jax.random.PRNGKey(0)
    kx, kp = jax.random.split(key)
    x = jax.random.normal(kx, (batch, latent_dim), jnp.float32)
    w1, b1, w2, b2 = init_decoder_params(kp, native_dim, hidden_layer, latent_dim)

    # Auto tile selection (2 grid steps here), lane-dense padded output.
    out = otnvae_decoder(x, w1, b1, w2, b2)
    out = jax.block_until_ready(out)
    ref = reference_decoder(x, w1, b1, w2, b2)
    assert out.shape == (batch, native_dim)
    assert jnp.allclose(out, ref, atol=1e-5, rtol=1e-5), "mismatch vs reference (f32)"

    # Ragged batch (not a multiple of the tile) exercises the padding path.
    x_rag = jax.random.normal(kx, (13, latent_dim), jnp.float32)
    out_rag = jax.block_until_ready(otnvae_decoder(x_rag, w1, b1, w2, b2, batch_tile=8))
    ref_rag = reference_decoder(x_rag, w1, b1, w2, b2)
    assert out_rag.shape == (13, native_dim)
    assert jnp.allclose(out_rag, ref_rag, atol=1e-5, rtol=1e-5), "mismatch vs reference (ragged)"

    # Optional bf16 streaming path (v6e/v7x); looser tolerance due to bf16 weights/activations.
    out_bf16 = jax.block_until_ready(
        otnvae_decoder(x, w1, b1, w2, b2, compute_dtype=jnp.bfloat16))
    assert jnp.allclose(out_bf16, ref, atol=5e-2, rtol=5e-2), "mismatch vs reference (bf16)"

    print("KERNEL_OK")
</pallas_src>

<mosaic_0001>
module attributes {stable_mosaic.version = 11 : i64} {
  func.func @_decoder_kernel(%arg0: i32, %arg1: memref<8x8xf32, #tpu.memory_space<vmem>>, %arg2: memref<8x32xf32, #tpu.memory_space<vmem>>, %arg3: memref<1x32xf32, #tpu.memory_space<vmem>>, %arg4: memref<32x128xf32, #tpu.memory_space<vmem>>, %arg5: memref<1x128xf32, #tpu.memory_space<vmem>>, %arg6: memref<8x128xf32, #tpu.memory_space<vmem>>) attributes {dimension_semantics = [#tpu.dimension_semantics<parallel>], iteration_bounds = array<i64: 2>, scalar_prefetch = 0 : i64, scratch_operands = 0 : i64, tpu.core_type = #tpu.core_type<tc>, window_params = [{transform_indices = @transform_0, window_bounds = array<i64: 8, 8>}, {pipeline_mode = #tpu.pipeline_mode<synchronous>, transform_indices = @transform_1, window_bounds = array<i64: 8, 32>}, {pipeline_mode = #tpu.pipeline_mode<synchronous>, transform_indices = @transform_2, window_bounds = array<i64: 1, 32>}, {pipeline_mode = #tpu.pipeline_mode<synchronous>, transform_indices = @transform_3, window_bounds = array<i64: 32, 128>}, {pipeline_mode = #tpu.pipeline_mode<synchronous>, transform_indices = @transform_4, window_bounds = array<i64: 1, 128>}, {transform_indices = @transform_5, window_bounds = array<i64: 8, 128>}]} {
    %c0 = arith.constant 0 : index
    %c0_0 = arith.constant 0 : index
    %0 = vector.load %arg1[%c0, %c0_0] : memref<8x8xf32, #tpu.memory_space<vmem>>, vector<8x8xf32>
    %c0_1 = arith.constant 0 : index
    %c0_2 = arith.constant 0 : index
    %1 = vector.load %arg2[%c0_1, %c0_2] : memref<8x32xf32, #tpu.memory_space<vmem>>, vector<8x32xf32>
    %cst = arith.constant dense<0.000000e+00> : vector<8x32xf32>
    %2 = tpu.matmul %0, %1, %cst {dimension_numbers = #tpu.dot_dimension_numbers<[1], [0], [0], [1], [0, 0, 1, 1], [], []>} : vector<8x8xf32>, vector<8x32xf32>, vector<8x32xf32> -> vector<8x32xf32>
    %c0_3 = arith.constant 0 : index
    %c0_4 = arith.constant 0 : index
    %3 = vector.load %arg3[%c0_3, %c0_4] : memref<1x32xf32, #tpu.memory_space<vmem>>, vector<1x32xf32>
    %4 = vector.broadcast %3 : vector<1x32xf32> to vector<8x32xf32>
    %5 = arith.addf %2, %4 : vector<8x32xf32>
    %cst_5 = arith.constant 0.000000e+00 : f32
    %6 = vector.broadcast %cst_5 : f32 to vector<8x32xf32>
    %7 = arith.cmpf ogt, %5, %6 : vector<8x32xf32>
    %cst_6 = arith.constant 2.000000e-01 : f32
    %8 = vector.broadcast %cst_6 : f32 to vector<8x32xf32>
    %9 = arith.mulf %8, %5 : vector<8x32xf32>
    %10 = arith.select %7, %5, %9 : vector<8x32xi1>, vector<8x32xf32>
    %c0_7 = arith.constant 0 : index
    %c0_8 = arith.constant 0 : index
    %11 = vector.load %arg4[%c0_7, %c0_8] : memref<32x128xf32, #tpu.memory_space<vmem>>, vector<32x128xf32>
    %cst_9 = arith.constant dense<0.000000e+00> : vector<8x128xf32>
    %12 = tpu.matmul %10, %11, %cst_9 {dimension_numbers = #tpu.dot_dimension_numbers<[1], [0], [0], [1], [0, 0, 1, 1], [], []>} : vector<8x32xf32>, vector<32x128xf32>, vector<8x128xf32> -> vector<8x128xf32>
    %c0_10 = arith.constant 0 : index
    %c0_11 = arith.constant 0 : index
    %13 = vector.load %arg5[%c0_10, %c0_11] : memref<1x128xf32, #tpu.memory_space<vmem>>, vector<1x128xf32>
    %14 = vector.broadcast %13 : vector<1x128xf32> to vector<8x128xf32>
    %15 = arith.addf %12, %14 : vector<8x128xf32>
    %c0_12 = arith.constant 0 : index
    %c0_13 = arith.constant 0 : index
    %16 = vector.load %arg6[%c0_12, %c0_13] : memref<8x128xf32, #tpu.memory_space<vmem>>, vector<8x128xf32>
    tpu.vector_store %arg6[%c0_12, %c0_13], %15 {strides = array<i32>} : memref<8x128xf32, #tpu.memory_space<vmem>>, vector<8x128xf32>,
    return
  }
  func.func @transform_0(%arg0: i32) -> (i32, i32) {
    %c0_i32 = arith.constant 0 : i32
    %c0_i32_0 = arith.constant 0 : i32
    return %arg0, %c0_i32 : i32, i32
  }
  func.func @transform_1(%arg0: i32) -> (i32, i32) {
    %c0_i32 = arith.constant 0 : i32
    %c0_i32_0 = arith.constant 0 : i32
    %c0_i32_1 = arith.constant 0 : i32
    return %c0_i32, %c0_i32_0 : i32, i32
  }
  func.func @transform_2(%arg0: i32) -> (i32, i32) {
    %c0_i32 = arith.constant 0 : i32
    %c0_i32_0 = arith.constant 0 : i32
    %c0_i32_1 = arith.constant 0 : i32
    return %c0_i32, %c0_i32_0 : i32, i32
  }
  func.func @transform_3(%arg0: i32) -> (i32, i32) {
    %c0_i32 = arith.constant 0 : i32
    %c0_i32_0 = arith.constant 0 : i32
    %c0_i32_1 = arith.constant 0 : i32
    return %c0_i32, %c0_i32_0 : i32, i32
  }
  func.func @transform_4(%arg0: i32) -> (i32, i32) {
    %c0_i32 = arith.constant 0 : i32
    %c0_i32_0 = arith.constant 0 : i32
    %c0_i32_1 = arith.constant 0 : i32
    return %c0_i32, %c0_i32_0 : i32, i32
  }
  func.func @transform_5(%arg0: i32) -> (i32, i32) {
    %c0_i32 = arith.constant 0 : i32
    %c0_i32_0 = arith.constant 0 : i32
    return %arg0, %c0_i32 : i32, i32
  }
}

</mosaic_0001>

<llo_original>
// kernel: otnvae_decoder.1
$region0: #{otnvae_decoder.1}
  #allocation0 [shape = 'u32[]', space=smem, size = 0x4, offset = 0x4, fixed_abs, tag = 'smem constant byte address 0x4 - core index']
  #allocation1 [shape = 'u32[144,128]{1,0:T(1,128)}', space=vmem, size = 0x12000, scoped, tag = 'internal scratch']
  %s0 = inlined_call_operand.vmem [shape: f32[16,8], index: 0, kind: input, shape index: {}]
  %s1 = inlined_call_operand.vmem [shape: f32[8,32], index: 1, kind: input, shape index: {}]
  %s2 = inlined_call_operand.vmem [shape: f32[1,32], index: 2, kind: input, shape index: {}]
  %s3 = inlined_call_operand.vmem [shape: f32[32,128], index: 3, kind: input, shape index: {}]
  %s4 = inlined_call_operand.vmem [shape: f32[1,128], index: 4, kind: input, shape index: {}]
  %s5 = inlined_call_operand.hbm [shape: f32[16,128], index: 5, kind: output, shape index: {}]
  %s6 = sld [smem:[#allocation0]]
  $region53: #{otnvae_decoder.1} parent=0
    _
  %s8 = ssub.s32 1, %s6
  %s9 = scalar_select 0, %s8, %s6
  $region1: #{otnvae_decoder.1} parent=0
    #allocation2 [shape = 'u8[8192]{0}', space=vmem, size = 0x2000, scoped, tag = 'output window, operand 0']
    #allocation3 [shape = 's32[2]{0}', space=sflag, size = 0x8, scoped, tag = 'scoped memory for otnvae_decoder.1']
    %10 = vsyncpa [#allocation3], 0
    %s11 = scalar_lea.sflag [#allocation3], 1
    %12 = vsyncpa %s11, 0
    loop: start=0, step=1, limit=4
    $region2: #{otnvae_decoder.1} parent=1 // loop_pre_header
      _
    $region3: #{otnvae_decoder.1} parent=1 // loop_header
      %s14 = sphi 0, %s18
      %p15 = scmp.ge.s32.totalorder %s14, 4
      %s24 = sphi 0, %s26
      %s27 = sphi 0, %s24
      %s28 = sphi 0, %s27
      %s44 = sphi 0, %s28
      %s48 = sphi 0, %s48
      %s50 = sphi 0, %s48
      %s51 = sphi 0, %s50
      %s65 = sphi 0, %s51
      %s69 = sphi 0, %s69
      %s71 = sphi 0, %s69
      %s72 = sphi 0, %s71
      %s86 = sphi 0, %s72
      %s90 = sphi 0, %s90
      %s92 = sphi 0, %s90
      %s93 = sphi 0, %s92
      %s107 = sphi 0, %s93
      %s111 = sphi 0, %s111
      %s113 = sphi 0, %s111
      %s114 = sphi 0, %s113
      %s128 = sphi 0, %s114
      %s134 = sphi 0, %s136
      %s137 = sphi 0, %s134
      %s138 = sphi 0, %s137
      %s154 = sphi 0, %s138
    $region4: #{otnvae_decoder.1} parent=1 // loop_header_branch
      %17 = sbr.rel (%p15) target = $region8
    $region5: #{otnvae_decoder.1} parent=1 // loop_body
      %s19 = ssub.s32 %s14, 1
      %s20 = ssub.s32 %s14, 2
      %s21 = sadd.s32 %s14, 1
      %s22 = ssub.s32 %s14, %s21
      %p23 = scmp.eq.s32.totalorder %s22, 0
      %s25 = sadd.s32 %s24, 1
      %s26 = scalar_select %p23, %s24, %s25
      %p29 = pneg %p23
      %p30 = scmp.eq.s32.totalorder %s14, 1
      %p31 = por %p29, %p30
      %p32 = scmp.ne.s32.totalorder %s24, %s27
      %p33 = scmp.eq.s32.totalorder %s14, 0
      %p34 = por %p32, %p33
      %p35 = scmp.ne.s32.totalorder %s24, %s27
      %p36 = scmp.eq.s32.totalorder %s19, 1
      %p37 = por %p35, %p36
      %p38 = scmp.ne.s32.totalorder %s27, %s28
      %p39 = scmp.eq.s32.totalorder %s19, 0
      %p40 = por %p38, %p39
      %p41 = scmp.ne.s32.totalorder %s27, %s28
      %p42 = scmp.eq.s32.totalorder %s20, 1
      %p43 = por %p41, %p42
      %p45 = scmp.ne.s32.totalorder %s28, %s44
      %p46 = scmp.eq.s32.totalorder %s20, 0
      %p47 = por %p45, %p46
      %s49 = sadd.s32 %s48, 1
      %p52 = scmp.eq.s32.totalorder %s14, 1
      %p53 = scmp.ne.s32.totalorder %s48, %s50
      %p54 = scmp.eq.s32.totalorder %s14, 0
      %p55 = por %p53, %p54
      %p56 = scmp.ne.s32.totalorder %s48, %s50
      %p57 = scmp.eq.s32.totalorder %s19, 1
      %p58 = por %p56, %p57
      %p59 = scmp.ne.s32.totalorder %s50, %s51
      %p60 = scmp.eq.s32.totalorder %s19, 0
      %p61 = por %p59, %p60
      %p62 = scmp.ne.s32.totalorder %s50, %s51
      %p63 = scmp.eq.s32.totalorder %s20, 1
      %p64 = por %p62, %p63
      %p66 = scmp.ne.s32.totalorder %s51, %s65
      %p67 = scmp.eq.s32.totalorder %s20, 0
      %p68 = por %p66, %p67
      %s70 = sadd.s32 %s69, 1
      %p73 = scmp.eq.s32.totalorder %s14, 1
      %p74 = scmp.ne.s32.totalorder %s69, %s71
      %p75 = scmp.eq.s32.totalorder %s14, 0
      %p76 = por %p74, %p75
      %p77 = scmp.ne.s32.totalorder %s69, %s71
      %p78 = scmp.eq.s32.totalorder %s19, 1
      %p79 = por %p77, %p78
      %p80 = scmp.ne.s32.totalorder %s71, %s72
      %p81 = scmp.eq.s32.totalorder %s19, 0
      %p82 = por %p80, %p81
      %p83 = scmp.ne.s32.totalorder %s71, %s72
      %p84 = scmp.eq.s32.totalorder %s20, 1
      %p85 = por %p83, %p84
      %p87 = scmp.ne.s32.totalorder %s72, %s86
      %p88 = scmp.eq.s32.totalorder %s20, 0
      %p89 = por %p87, %p88
      %s91 = sadd.s32 %s90, 1
      %p94 = scmp.eq.s32.totalorder %s14, 1
      %p95 = scmp.ne.s32.totalorder %s90, %s92
      %p96 = scmp.eq.s32.totalorder %s14, 0
      %p97 = por %p95, %p96
      %p98 = scmp.ne.s32.totalorder %s90, %s92
      %p99 = scmp.eq.s32.totalorder %s19, 1
      %p100 = por %p98, %p99
      %p101 = scmp.ne.s32.totalorder %s92, %s93
      %p102 = scmp.eq.s32.totalorder %s19, 0
      %p103 = por %p101, %p102
      %p104 = scmp.ne.s32.totalorder %s92, %s93
      %p105 = scmp.eq.s32.totalorder %s20, 1
      %p106 = por %p104, %p105
      %p108 = scmp.ne.s32.totalorder %s93, %s107
      %p109 = scmp.eq.s32.totalorder %s20, 0
      %p110 = por %p108, %p109
      %s112 = sadd.s32 %s111, 1
      %p115 = scmp.eq.s32.totalorder %s14, 1
      %p116 = scmp.ne.s32.totalorder %s111, %s113
      %p117 = scmp.eq.s32.totalorder %s14, 0
      %p118 = por %p116, %p117
      %p119 = scmp.ne.s32.totalorder %s111, %s113
      %p120 = scmp.eq.s32.totalorder %s19, 1
      %p121 = por %p119, %p120
      %p122 = scmp.ne.s32.totalorder %s113, %s114
      %p123 = scmp.eq.s32.totalorder %s19, 0
      %p124 = por %p122, %p123
      %p125 = scmp.ne.s32.totalorder %s113, %s114
      %p126 = scmp.eq.s32.totalorder %s20, 1
      %p127 = por %p125, %p126
      %p129 = scmp.ne.s32.totalorder %s114, %s128
      %p130 = scmp.eq.s32.totalorder %s20, 0
      %p131 = por %p129, %p130
      %s132 = ssub.s32 %s14, %s21
      %p133 = scmp.eq.s32.totalorder %s132, 0
      %s135 = sadd.s32 %s134, 1
      %s136 = scalar_select %p133, %s134, %s135
      %p139 = pneg %p133
      %p140 = scmp.eq.s32.totalorder %s14, 1
      %p141 = por %p139, %p140
      %p142 = scmp.ne.s32.totalorder %s134, %s137
      %p143 = scmp.eq.s32.totalorder %s14, 0
      %p144 = por %p142, %p143
      %p145 = scmp.ne.s32.totalorder %s134, %s137
      %p146 = scmp.eq.s32.totalorder %s19, 1
      %p147 = por %p145, %p146
      %p148 = scmp.ne.s32.totalorder %s137, %s138
      %p149 = scmp.eq.s32.totalorder %s19, 0
      %p150 = por %p148, %p149
      %p151 = scmp.ne.s32.totalorder %s137, %s138
      %p152 = scmp.eq.s32.totalorder %s20, 1
      %p153 = por %p151, %p152
      %p155 = scmp.ne.s32.totalorder %s138, %s154
      %p156 = scmp.eq.s32.totalorder %s20, 0
      %p157 = por %p155, %p156
      %p158 = scmp.le.s32.totalorder 1, %s14
      %p159 = scmp.lt.s32.totalorder %s14, 3
      %p160 = pnand %p158, %p159
      %p161 = pneg %p160
      // Predicated region
      $region9: #{otnvae_decoder.1} parent=5 // pred_check
        _
      $region10: #{otnvae_decoder.1} parent=5 // pred_check_branch
        %163 = sbr.rel (%p160) target = $region12
      $region11: #{otnvae_decoder.1} parent=5 // pred_region
        %s164 = ssub.s32 %s14, 1
        // Predicated region
        $region13: #{otnvae_decoder.1} parent=11 // pred_check
          %p165 = pneg %p61
        $region14: #{otnvae_decoder.1} parent=11 // pred_check_branch
          %167 = sbr.rel (%p165) target = $region16
        $region15: #{otnvae_decoder.1} parent=11 // pred_region
          _
        $region16: #{otnvae_decoder.1} parent=11 // pred_fallthru
          _
        // Predicated region
        $region17: #{otnvae_decoder.1} parent=11 // pred_check
          %p168 = pneg %p82
        $region18: #{otnvae_decoder.1} parent=11 // pred_check_branch
          %170 = sbr.rel (%p168) target = $region20
        $region19: #{otnvae_decoder.1} parent=11 // pred_region
          _
        $region20: #{otnvae_decoder.1} parent=11 // pred_fallthru
          _
        // Predicated region
        $region21: #{otnvae_decoder.1} parent=11 // pred_check
          %p171 = pneg %p103
        $region22: #{otnvae_decoder.1} parent=11 // pred_check_branch
          %173 = sbr.rel (%p171) target = $region24
        $region23: #{otnvae_decoder.1} parent=11 // pred_region
          _
        $region24: #{otnvae_decoder.1} parent=11 // pred_fallthru
          _
        // Predicated region
        $region25: #{otnvae_decoder.1} parent=11 // pred_check
          %p174 = pneg %p124
        $region26: #{otnvae_decoder.1} parent=11 // pred_check_branch
          %176 = sbr.rel (%p174) target = $region28
        $region27: #{otnvae_decoder.1} parent=11 // pred_region
          _
        $region28: #{otnvae_decoder.1} parent=11 // pred_fallthru
          _
      $region12: #{otnvae_decoder.1} parent=5 // pred_fallthru
        _
      %p177 = scmp.lt.s32.totalorder %s14, 2
      // Predicated region
      $region29: #{otnvae_decoder.1} parent=5 // pred_check
        %p178 = pneg %p177
      $region30: #{otnvae_decoder.1} parent=5 // pred_check_branch
        %180 = sbr.rel (%p178) target = $region32
      $region31: #{otnvae_decoder.1} parent=5 // pred_region
        // Predicated region
        $region33: #{otnvae_decoder.1} parent=31 // pred_check
          %p181 = pneg %p34
        $region34: #{otnvae_decoder.1} parent=31 // pred_check_branch
          %183 = sbr.rel (%p181) target = $region36
        $region35: #{otnvae_decoder.1} parent=31 // pred_region
          %p184 = scmp.lt.s32.totalorder %s14, 1
          %s185 = scalar_select %p184, %s14, 1
          %s186 = smul.addr %s185, 8
          %s187 = scalar_lea.vmem %s0, %s186
        $region36: #{otnvae_decoder.1} parent=31 // pred_fallthru
          _
      $region32: #{otnvae_decoder.1} parent=5 // pred_fallthru
        _
      %p188 = scmp.le.s32.totalorder 1, %s14
      %p189 = scmp.lt.s32.totalorder %s14, 3
      %p190 = pnand %p188, %p189
      %p191 = pneg %p190
      // Predicated region
      $region37: #{otnvae_decoder.1} parent=5 // pred_check
        _
      $region38: #{otnvae_decoder.1} parent=5 // pred_check_branch
        %193 = sbr.rel (%p190) target = $region40
      $region39: #{otnvae_decoder.1} parent=5 // pred_region
        %s194 = ssub.s32 %s14, 1
        %p195 = scmp.lt.s32.totalorder %s19, 1
        %s196 = scalar_select %p195, %s19, 1
        %s197 = smul.addr %s196, 8
        %s198 = scalar_lea.vmem %s0, %s197
        %p199 = pneg %p40
        %p200 = pneg %p37
        %p201 = pneg %p61
        %p202 = pneg %p58
        %p203 = pneg %p82
        %p204 = pneg %p79
        %p205 = pneg %p103
        %p206 = pneg %p100
        %p207 = pneg %p124
        %p208 = pneg %p121
        %p209 = pneg %p150
        %p210 = pneg %p147
        %s211 = sand.u32 %s137, 1
        %s212 = scalar_lea.sflag [#allocation3], %s211
        %s213 = sand.u32 %s137, 1
        %s214 = smul.addr %s213, 8
        %s215 = scalar_lea.vmem [#allocation2], %s214
        %p216 = scmp.lt.s32.totalorder %s19, 1
        %s217 = scalar_select %p216, %s19, 1
        %s218 = smul.addr %s217, 8
        %s219 = scalar_lea.vmem %s0, %s218
        %v220 = vld [vmem:[%s219] sm:$0xff]
        %v221 = vld [vmem:[%s1] sm:$0xff]
        %v222 = vld [vmem:[%s2] sm:$0x1]
        %v224 = vlaneseq
        %v225 = vshrl.u32 %v224, 7
        %v226 = vsub.s32 0, %v225
        %v227 = vrot.slane %v222, %v226
        %vm229 = vcmask 64512
        %v231 = vsel %vm229, %v220, 0
        %233 = vmatprep.subr.mxu0 0.0
        %234 = vmatpush1.msra.mxu0 0.0
        %235 = vmatprep.subr.mxu0 0.0
        %236 = vmatpush1.msra.mxu0 0.0
        %237 = vmatprep.subr.mxu0 0.0
        %238 = vmatpush1.msra.mxu0 0.0
        %239 = vmatprep.subr.mxu0 0.0
        %240 = vmatpush1.msra.mxu0 0.0
        %241 = vmatprep.subr.mxu0 0.0
        %242 = vmatpush1.msra.mxu0 0.0
        %243 = vmatprep.subr.mxu0 0.0
        %244 = vmatpush1.msra.mxu0 0.0
        %245 = vmatprep.subr.mxu0 0.0
        %246 = vmatpush1.msra.mxu0 0.0
        %247 = vmatprep.subr.mxu0 0.0
        %248 = vmatpush1.msra.mxu0 0.0
        %249 = vmatprep.subr.mxu0 0.0
        %250 = vmatpush1.msra.mxu0 0.0
        %251 = vmatprep.subr.mxu0 0.0
        %252 = vmatpush1.msra.mxu0 0.0
        %253 = vmatprep.subr.mxu0 0.0
        %254 = vmatpush1.msra.mxu0 0.0
        %255 = vmatprep.subr.mxu0 0.0
        %256 = vmatpush1.msra.mxu0 0.0
        %257 = vmatprep.subr.mxu0 0.0
        %258 = vmatpush1.msra.mxu0 0.0
        %259 = vmatprep.subr.mxu0 0.0
        %260 = vmatpush1.msra.mxu0 0.0
        %261 = vmatprep.subr.mxu0 0.0
        %262 = vmatpush1.msra.mxu0 0.0
        %263 = vmatprep.subr.mxu0 0.0
        %264 = vmatpush1.msra.mxu0 %v221
        %265 = vmatprep.subr.mxu0 0.0
        %266 = vmatpush2.msra.mxu0 0.0
        %267 = vmatprep.subr.mxu0 0.0
        %268 = vmatpush2.msra.mxu0 0.0
        %269 = vmatprep.subr.mxu0 0.0
        %270 = vmatpush2.msra.mxu0 0.0
        %271 = vmatprep.subr.mxu0 0.0
        %272 = vmatpush2.msra.mxu0 0.0
        %273 = vmatprep.subr.mxu0 0.0
        %274 = vmatpush2.msra.mxu0 0.0
        %275 = vmatprep.subr.mxu0 0.0
        %276 = vmatpush2.msra.mxu0 0.0
        %277 = vmatprep.subr.mxu0 0.0
        %278 = vmatpush2.msra.mxu0 0.0
        %279 = vmatprep.subr.mxu0 0.0
        %280 = vmatpush2.msra.mxu0 0.0
        %281 = vmatprep.subr.mxu0 0.0
        %282 = vmatpush2.msra.mxu0 0.0
        %283 = vmatprep.subr.mxu0 0.0
        %284 = vmatpush2.msra.mxu0 0.0
        %285 = vmatprep.subr.mxu0 0.0
        %286 = vmatpush2.msra.mxu0 0.0
        %287 = vmatprep.subr.mxu0 0.0
        %288 = vmatpush2.msra.mxu0 0.0
        %289 = vmatprep.subr.mxu0 0.0
        %290 = vmatpush2.msra.mxu0 0.0
        %291 = vmatprep.subr.mxu0 0.0
        %292 = vmatpush2.msra.mxu0 0.0
        %293 = vmatprep.subr.mxu0 0.0
        %294 = vmatpush2.msra.mxu0 0.0
        %295 = vmatprep.subr.mxu0 0.0
        %296 = vmatpush2.msra.mxu0 0.0
        %297 = vmatprep.mubr.f32.mxu0 0.0
        %298 = vmatmul.mubr.f32.gmra.mxu0 %v231
        %v299 = vpop.f32.mrf.mxu0
        %v300 = vadd.f32 %v227, %v299
        %v301 = vpop.f32.mrf.mxu0
        %302 = vdwg.mxu0
        %vm303 = vcmp.gt.f32.partialorder %v300, 0.0
        %v304 = vmul.f32 %v300, 0.2
        %v305 = vsel %vm303, %v300, %v304
        %v306 = vld [vmem:[%s3] sm:$0xff]
        %v307 = vld [vmem:[%s3 + $0x8] sm:$0xff]
        %v308 = vld [vmem:[%s3 + $0x10] sm:$0xff]
        %v309 = vld [vmem:[%s3 + $0x18] sm:$0xff]
        %v310 = vld [vmem:[%s4] sm:$0x1]
        %v312 = vlaneseq
        %v313 = vshrl.u32 %v312, 7
        %v314 = vsub.s32 0, %v313
        %v315 = vrot.slane %v310, %v314
        %vm317 = vcmask 261120
        %v319 = vsel %vm317, %v305, 0
        %321 = vmatprep.subr.mxu0 0.0
        %322 = vmatpush1.msra.mxu0 0.0
        %323 = vmatprep.subr.mxu0 0.0
        %324 = vmatpush1.msra.mxu0 0.0
        %325 = vmatprep.subr.mxu0 0.0
        %326 = vmatpush1.msra.mxu0 0.0
        %327 = vmatprep.subr.mxu0 0.0
        %328 = vmatpush1.msra.mxu0 0.0
        %329 = vmatprep.subr.mxu0 0.0
        %330 = vmatpush1.msra.mxu0 0.0
        %331 = vmatprep.subr.mxu0 0.0
        %332 = vmatpush1.msra.mxu0 0.0
        %333 = vmatprep.subr.mxu0 0.0
        %334 = vmatpush1.msra.mxu0 0.0
        %335 = vmatprep.subr.mxu0 0.0
        %336 = vmatpush1.msra.mxu0 0.0
        %337 = vmatprep.subr.mxu0 0.0
        %338 = vmatpush1.msra.mxu0 0.0
        %339 = vmatprep.subr.mxu0 0.0
        %340 = vmatpush1.msra.mxu0 0.0
        %341 = vmatprep.subr.mxu0 0.0
        %342 = vmatpush1.msra.mxu0 0.0
        %343 = vmatprep.subr.mxu0 0.0
        %344 = vmatpush1.msra.mxu0 0.0
        %345 = vmatprep.subr.mxu0 0.0
        %346 = vmatpush1.msra.mxu0 %v309
        %347 = vmatprep.subr.mxu0 0.0
        %348 = vmatpush1.msra.mxu0 %v308
        %349 = vmatprep.subr.mxu0 0.0
        %350 = vmatpush1.msra.mxu0 %v307
        %351 = vmatprep.subr.mxu0 0.0
        %352 = vmatpush1.msra.mxu0 %v306
        %353 = vmatprep.subr.mxu0 0.0
        %354 = vmatpush2.msra.mxu0 0.0
        %355 = vmatprep.subr.mxu0 0.0
        %356 = vmatpush2.msra.mxu0 0.0
        %357 = vmatprep.subr.mxu0 0.0
        %358 = vmatpush2.msra.mxu0 0.0
        %359 = vmatprep.subr.mxu0 0.0
        %360 = vmatpush2.msra.mxu0 0.0
        %361 = vmatprep.subr.mxu0 0.0
        %362 = vmatpush2.msra.mxu0 0.0
        %363 = vmatprep.subr.mxu0 0.0
        %364 = vmatpush2.msra.mxu0 0.0
        %365 = vmatprep.subr.mxu0 0.0
        %366 = vmatpush2.msra.mxu0 0.0
        %367 = vmatprep.subr.mxu0 0.0
        %368 = vmatpush2.msra.mxu0 0.0
        %369 = vmatprep.subr.mxu0 0.0
        %370 = vmatpush2.msra.mxu0 0.0
        %371 = vmatprep.subr.mxu0 0.0
        %372 = vmatpush2.msra.mxu0 0.0
        %373 = vmatprep.subr.mxu0 0.0
        %374 = vmatpush2.msra.mxu0 0.0
        %375 = vmatprep.subr.mxu0 0.0
        %376 = vmatpush2.msra.mxu0 0.0
        %377 = vmatprep.subr.mxu0 0.0
        %378 = vmatpush2.msra.mxu0 0.0
        %379 = vmatprep.subr.mxu0 0.0
        %380 = vmatpush2.msra.mxu0 0.0
        %381 = vmatprep.subr.mxu0 0.0
        %382 = vmatpush2.msra.mxu0 0.0
        %383 = vmatprep.subr.mxu0 0.0
        %384 = vmatpush2.msra.mxu0 0.0
        %385 = vmatprep.mubr.f32.mxu0 0.0
        %386 = vmatmul.mubr.f32.gmra.mxu0 %v319
        %v387 = vpop.f32.mrf.mxu0
        %v388 = vadd.f32 %v315, %v387
        %v389 = vpop.f32.mrf.mxu0
        %390 = vdwg.mxu0
        %391 = vst [vmem:[%s215] sm:$0xff] %v388
        %s392 = sand.u32 %s137, 1
        %s393 = scalar_lea.sflag [#allocation3], %s392
        %s394 = sand.u32 %s137, 1
        %s395 = smul.addr %s394, 8
        %s396 = scalar_lea.vmem [#allocation2], %s395
        // Predicated region
        $region41: #{otnvae_decoder.1} parent=39 // pred_check
          %p397 = pneg %p147
        $region42: #{otnvae_decoder.1} parent=39 // pred_check_branch
          %399 = sbr.rel (%p397) target = $region44
        $region43: #{otnvae_decoder.1} parent=39 // pred_region
          %s401 = ssub.s32 128, 128
          %402 = vsyncadd %s393, %s401
          %s403 = smul.addr %s19, 128
          %s404 = scalar_lea.hbm %s5, %s403
          %s406 = sshll.u32 %s396, 4
          %s407 = int_to_ptr.vmem [resolvable:$true] %s406
          %409 = dma.vmem_to_hbm [thread:$0]  %s407, 128, %s404, %s393
        $region44: #{otnvae_decoder.1} parent=39 // pred_fallthru
          _
      $region40: #{otnvae_decoder.1} parent=5 // pred_fallthru
        _
      %p410 = scmp.le.s32.totalorder 2, %s14
      // Predicated region
      $region45: #{otnvae_decoder.1} parent=5 // pred_check
        %p411 = pneg %p410
      $region46: #{otnvae_decoder.1} parent=5 // pred_check_branch
        %413 = sbr.rel (%p411) target = $region48
      $region47: #{otnvae_decoder.1} parent=5 // pred_region
        %s414 = ssub.s32 %s14, 2
        // Predicated region
        $region49: #{otnvae_decoder.1} parent=47 // pred_check
          %p415 = pneg %p153
        $region50: #{otnvae_decoder.1} parent=47 // pred_check_branch
          %417 = sbr.rel (%p415) target = $region52
        $region51: #{otnvae_decoder.1} parent=47 // pred_region
          %s418 = sand.u32 %s138, 1
          %s419 = scalar_lea.sflag [#allocation3], %s418
          %s420 = sand.u32 %s138, 1
          %s421 = smul.addr %s420, 8
          %s422 = scalar_lea.vmem [#allocation2], %s421
          %423 = dma.done %s419, 128
        $region52: #{otnvae_decoder.1} parent=47 // pred_fallthru
          _
      $region48: #{otnvae_decoder.1} parent=5 // pred_fallthru
        _
    $region6: #{otnvae_decoder.1} parent=1 // loop_footer
      %s18 = sadd.s32 1, %s14
    $region7: #{otnvae_decoder.1} parent=1 // loop_footer_branch
      %13 = sbr.rel target = $region3
    $region8: #{otnvae_decoder.1} parent=1 // loop_exit
      _
    %424 = vsyncpa [#allocation3], 1
    %s425 = scalar_lea.sflag [#allocation3], 1
    %426 = vsyncpa %s425, 1

</llo_original>
